<compile_context>
chip_gen: v7x
topology: tpu7x:2x2x1
jax: 0.10.0
libtpu: 0.0.40
codegen_flags: <defaults>
</compile_context>

<pallas_src>
import functools

import jax
import jax.numpy as jnp
from jax import lax
from jax.experimental import pallas as pl
from jax.experimental.pallas import tpu as pltpu


def _round_up(a: int, b: int) -> int:
    return (a + b - 1) // b * b


def _cdiv(a: int, b: int) -> int:
    return (a + b - 1) // b


def _downsample_kernel(xe_ref, xo_ref, w01_ref, w2_ref, b_ref, o_ref, *, M, Wh, C):
    """One output row tile = 6 MXU GEMMs over column-pair-packed input bands.

    xe_ref: (M + Wh + 1, 2C)  even padded rows of this tile (+1 halo row +1 elem)
    xo_ref: (M + 1, 2C)       odd padded rows of this tile
    w01_ref: (3, 2C, Cout_p)  [W[ky,0]; W[ky,1]] stacked along K
    w2_ref:  (3, C,  Cout_p)  W[ky,2]
    b_ref:   (1, Cout_p)      bias (f32)
    o_ref:   (M, Cout_p)      output tile (rows = tho*Wh flattened (row, col-pair))
    """
    f32 = jnp.float32
    # taps kx=0,1 : contraction over the packed 2C lanes
    acc = jnp.dot(xe_ref[0:M, :], w01_ref[0], preferred_element_type=f32)
    acc = acc + jnp.dot(xo_ref[0:M, :], w01_ref[1], preferred_element_type=f32)
    acc = acc + jnp.dot(xe_ref[Wh:Wh + M, :], w01_ref[2], preferred_element_type=f32)
    # tap kx=2 : the even half of the *next* column pair == +1 row in the
    # flattened (row, col-pair) band -> static shifted sub-window loads.
    acc = acc + jnp.dot(xe_ref[1:M + 1, 0:C], w2_ref[0], preferred_element_type=f32)
    acc = acc + jnp.dot(xo_ref[1:M + 1, 0:C], w2_ref[1], preferred_element_type=f32)
    acc = acc + jnp.dot(xe_ref[Wh + 1:Wh + 1 + M, 0:C], w2_ref[2],
                        preferred_element_type=f32)
    o_ref[...] = (acc + b_ref[...]).astype(o_ref.dtype)


def downsample_forward(x_nchw, weight, bias, *, use_bf16=True):
    """Downsample.forward: F.pad(x,(0,1,0,1)) -> Conv2d(C,C,3,stride=2,pad=0).

    x_nchw: (N, C, H, W); weight: (Cout, Cin, 3, 3) [PyTorch OIHW]; bias: (Cout,).
    """
    N, C, H, W = x_nchw.shape
    Cout, Cin, KH, KW = weight.shape
    assert C == Cin and KH == 3 and KW == 3 and H >= 2 and W >= 2

    Ho = (H - 2) // 2 + 1                      # = floor((H+1-3)/2) + 1
    Wo = (W - 2) // 2 + 1
    Wh = Wo + 1                                # column pairs per row (incl. halo pair)
    K2 = 2 * C

    out_dtype = x_nchw.dtype
    cdt = jnp.bfloat16 if use_bf16 else out_dtype
    in_sz = jnp.dtype(cdt).itemsize
    out_sz = jnp.dtype(out_dtype).itemsize

    # Lane-dense output channels only when Cout spans at least one lane group.
    Cout_p = _round_up(Cout, 128) if Cout >= 128 else Cout

    # ---- per-generation VMEM budget & row-tile selection ---------------------
    try:
        vmem_cap = int(getattr(pltpu.get_tpu_info(), "vmem_capacity_bytes", 64 << 20))
    except Exception:
        vmem_cap = 64 << 20
    budget = (vmem_cap * 3) // 4

    def vmem_est(t):
        m = t * Wh
        v = 2 * ((m + Wh + 1) + (m + 1)) * K2 * in_sz   # double-buffered input bands
        v += 2 * 9 * C * Cout_p * in_sz                 # resident weights (x2 buffers)
        v += 2 * Cout_p * 4                             # bias
        v += 2 * m * Cout_p * out_sz                    # output blocks
        v += 2 * m * Cout_p * 4                         # live f32 accumulator
        return (v * 5) // 4

    tho = max(1, min(Ho, _cdiv(1024, Wh)))              # target M ~ 1024 GEMM rows
    if N == 1 and Ho >= 2:
        tho = min(tho, _cdiv(Ho, 2))                    # >= 2 grid steps (megacore)
    while tho > 1 and vmem_est(tho) > budget:
        tho = max(1, tho // 2)

    n_th = _cdiv(Ho, tho)
    Ho_pad = n_th * tho
    M = tho * Wh
    band_e = M + Wh + 1
    band_o = M + 1
    G = N * n_th

    # ---- glue: layout-only transform (no 9x im2col materialization) ---------
    He = Ho_pad + 2                 # even padded rows materialized per image
    Hodd = Ho_pad + 1               # odd padded rows
    Hp2 = 2 * He
    Wp2 = 2 * Wh

    x_nhwc = jnp.transpose(x_nchw, (0, 2, 3, 1)).astype(cdt)            # (N,H,W,C)
    xp = jnp.pad(x_nhwc, ((0, 0), (0, Hp2 - H), (0, Wp2 - W), (0, 0)))
    xp = xp.reshape(N, He, 2, Wh, K2)        # free: rows->(even,odd), cols->pairs
    fe = xp[:, :, 0].reshape(N, He * Wh, K2)          # even padded rows, flattened
    fo = xp[:, :Hodd, 1].reshape(N, Hodd * Wh, K2)    # odd padded rows, flattened
    # Per-tile bands with a one-row halo (tiny duplication instead of 9x im2col).
    xe_t = jnp.stack([fe[:, t * M:t * M + band_e] for t in range(n_th)],
                     axis=1).reshape(G, band_e, K2)
    xo_t = jnp.stack([fo[:, t * M:t * M + band_o] for t in range(n_th)],
                     axis=1).reshape(G, band_o, K2)

    # Weights: OIHW -> [ky, kx, Cin, Cout]; pack kx=0,1 along K, keep kx=2 apart.
    wt = jnp.transpose(weight, (2, 3, 1, 0)).astype(cdt)                # (3,3,C,Cout)
    w01 = jnp.concatenate([wt[:, 0], wt[:, 1]], axis=1)                 # (3,2C,Cout)
    w2 = wt[:, 2]                                                       # (3,C,Cout)
    b_row = bias.astype(jnp.float32).reshape(1, Cout)
    if Cout_p != Cout:
        w01 = jnp.pad(w01, ((0, 0), (0, 0), (0, Cout_p - Cout)))
        w2 = jnp.pad(w2, ((0, 0), (0, 0), (0, Cout_p - Cout)))
        b_row = jnp.pad(b_row, ((0, 0), (0, Cout_p - Cout)))

    vmem_limit = int(max(min(vmem_cap - (12 << 20), budget + (8 << 20)), 32 << 20))

    cost = pl.CostEstimate(
        flops=2 * N * Ho * Wo * 9 * C * Cout,
        transcendentals=0,
        bytes_accessed=int((xe_t.size + xo_t.size + w01.size + w2.size) * in_sz
                           + G * M * Cout_p * out_sz),
    )

    kernel = functools.partial(_downsample_kernel, M=M, Wh=Wh, C=C)

    out_tiles = pl.pallas_call(
        kernel,
        out_shape=jax.ShapeDtypeStruct((G, M, Cout_p), out_dtype),
        grid=(G,),
        in_specs=[
            pl.BlockSpec((None, band_e, K2), lambda i: (i, 0, 0)),   # even band
            pl.BlockSpec((None, band_o, K2), lambda i: (i, 0, 0)),   # odd band
            pl.BlockSpec((3, K2, Cout_p), lambda i: (0, 0, 0)),      # w01, resident
            pl.BlockSpec((3, C, Cout_p), lambda i: (0, 0, 0)),       # w2, resident
            pl.BlockSpec((1, Cout_p), lambda i: (0, 0)),             # bias, resident
        ],
        out_specs=pl.BlockSpec((None, M, Cout_p), lambda i: (i, 0, 0)),
        compiler_params=pltpu.CompilerParams(
            dimension_semantics=("parallel",),
            vmem_limit_bytes=vmem_limit),
        cost_estimate=cost,
    )(xe_t, xo_t, w01, w2, b_row)

    # (G, M, Cout_p) == (N, Ho_pad, Wh, Cout_p); crop fuses into the mandatory
    # NHWC -> NCHW transpose.
    out = out_tiles.reshape(N, Ho_pad, Wh, Cout_p)[:, :Ho, :Wo, :Cout]
    return jnp.transpose(out, (0, 3, 1, 2))


if __name__ == "__main__":
    key = jax.random.PRNGKey(0)
    kx, kw, kb = jax.random.split(key, 3)

    N, C, H, W = 2, 4, 16, 16
    x = jax.random.normal(kx, (N, C, H, W), dtype=jnp.float32)

    # Deterministic synthetic Conv2d(C, C, 3, stride=2, padding=0) parameters.
    fan_in = C * 3 * 3
    weight = jax.random.normal(kw, (C, C, 3, 3), dtype=jnp.float32) / jnp.sqrt(fan_in)
    bias = jax.random.normal(kb, (C,), dtype=jnp.float32) * 0.01

    out = jax.block_until_ready(downsample_forward(x, weight, bias))
    assert out.shape == (N, C, 8, 8), out.shape

    # Reference: same bf16-rounded operands, f32 accumulation (XLA conv), so the
    # only difference vs. the kernel is summation order.
    x_bf = x.astype(jnp.bfloat16).astype(jnp.float32)
    w_bf = weight.astype(jnp.bfloat16).astype(jnp.float32)
    x_pad = jnp.pad(x_bf, ((0, 0), (0, 0), (0, 1), (0, 1)))
    ref = lax.conv_general_dilated(
        x_pad, w_bf, window_strides=(2, 2), padding="VALID",
        dimension_numbers=("NCHW", "OIHW", "NCHW"),
        preferred_element_type=jnp.float32) + bias[None, :, None, None]

    assert jnp.allclose(out, ref, atol=2e-2, rtol=2e-2), "mismatch vs reference conv"
    print("KERNEL_OK")
</pallas_src>

<mosaic_0001>
module attributes {stable_mosaic.version = 11 : i64} {
  func.func @_downsample_kernel(%arg0: i32, %arg1: memref<1x82x8xbf16, #tpu.memory_space<vmem>>, %arg2: memref<1x73x8xbf16, #tpu.memory_space<vmem>>, %arg3: memref<3x8x4xbf16, #tpu.memory_space<vmem>>, %arg4: memref<3x4x4xbf16, #tpu.memory_space<vmem>>, %arg5: memref<1x4xf32, #tpu.memory_space<vmem>>, %arg6: memref<1x72x4xf32, #tpu.memory_space<vmem>>) attributes {dimension_semantics = [#tpu.dimension_semantics<parallel>], iteration_bounds = array<i64: 2>, scalar_prefetch = 0 : i64, scratch_operands = 0 : i64, tpu.core_type = #tpu.core_type<tc>, window_params = [{transform_indices = @transform_0, window_bounds = array<i64: 1, 82, 8>}, {transform_indices = @transform_1, window_bounds = array<i64: 1, 73, 8>}, {pipeline_mode = #tpu.pipeline_mode<synchronous>, transform_indices = @transform_2, window_bounds = array<i64: 3, 8, 4>}, {pipeline_mode = #tpu.pipeline_mode<synchronous>, transform_indices = @transform_3, window_bounds = array<i64: 3, 4, 4>}, {pipeline_mode = #tpu.pipeline_mode<synchronous>, transform_indices = @transform_4, window_bounds = array<i64: 1, 4>}, {transform_indices = @transform_5, window_bounds = array<i64: 1, 72, 4>}]} {
    %c0 = arith.constant 0 : index
    %c0_0 = arith.constant 0 : index
    %c0_1 = arith.constant 0 : index
    %0 = vector.load %arg1[%c0, %c0_0, %c0_1] : memref<1x82x8xbf16, #tpu.memory_space<vmem>>, vector<1x72x8xbf16>
    %1 = vector.shape_cast %0 : vector<1x72x8xbf16> to vector<72x8xbf16>
    %c0_2 = arith.constant 0 : index
    %c0_3 = arith.constant 0 : index
    %c0_4 = arith.constant 0 : index
    %2 = vector.load %arg3[%c0_2, %c0_3, %c0_4] : memref<3x8x4xbf16, #tpu.memory_space<vmem>>, vector<1x8x4xbf16>
    %3 = vector.shape_cast %2 : vector<1x8x4xbf16> to vector<8x4xbf16>
    %cst = arith.constant dense<0.000000e+00> : vector<72x4xf32>
    %4 = tpu.matmul %1, %3, %cst {dimension_numbers = #tpu.dot_dimension_numbers<[1], [0], [0], [1], [0, 0, 1, 1], [], []>} : vector<72x8xbf16>, vector<8x4xbf16>, vector<72x4xf32> -> vector<72x4xf32>
    %c0_5 = arith.constant 0 : index
    %c0_6 = arith.constant 0 : index
    %c0_7 = arith.constant 0 : index
    %5 = vector.load %arg2[%c0_5, %c0_6, %c0_7] : memref<1x73x8xbf16, #tpu.memory_space<vmem>>, vector<1x72x8xbf16>
    %6 = vector.shape_cast %5 : vector<1x72x8xbf16> to vector<72x8xbf16>
    %c1 = arith.constant 1 : index
    %c0_8 = arith.constant 0 : index
    %c0_9 = arith.constant 0 : index
    %7 = vector.load %arg3[%c1, %c0_8, %c0_9] : memref<3x8x4xbf16, #tpu.memory_space<vmem>>, vector<1x8x4xbf16>
    %8 = vector.shape_cast %7 : vector<1x8x4xbf16> to vector<8x4xbf16>
    %cst_10 = arith.constant dense<0.000000e+00> : vector<72x4xf32>
    %9 = tpu.matmul %6, %8, %cst_10 {dimension_numbers = #tpu.dot_dimension_numbers<[1], [0], [0], [1], [0, 0, 1, 1], [], []>} : vector<72x8xbf16>, vector<8x4xbf16>, vector<72x4xf32> -> vector<72x4xf32>
    %10 = arith.addf %4, %9 : vector<72x4xf32>
    %c0_11 = arith.constant 0 : index
    %c9 = arith.constant 9 : index
    %c0_12 = arith.constant 0 : index
    %11 = vector.load %arg1[%c0_11, %c9, %c0_12] : memref<1x82x8xbf16, #tpu.memory_space<vmem>>, vector<1x72x8xbf16>
    %12 = vector.shape_cast %11 : vector<1x72x8xbf16> to vector<72x8xbf16>
    %c2 = arith.constant 2 : index
    %c0_13 = arith.constant 0 : index
    %c0_14 = arith.constant 0 : index
    %13 = vector.load %arg3[%c2, %c0_13, %c0_14] : memref<3x8x4xbf16, #tpu.memory_space<vmem>>, vector<1x8x4xbf16>
    %14 = vector.shape_cast %13 : vector<1x8x4xbf16> to vector<8x4xbf16>
    %cst_15 = arith.constant dense<0.000000e+00> : vector<72x4xf32>
    %15 = tpu.matmul %12, %14, %cst_15 {dimension_numbers = #tpu.dot_dimension_numbers<[1], [0], [0], [1], [0, 0, 1, 1], [], []>} : vector<72x8xbf16>, vector<8x4xbf16>, vector<72x4xf32> -> vector<72x4xf32>
    %16 = arith.addf %10, %15 : vector<72x4xf32>
    %c0_16 = arith.constant 0 : index
    %c1_17 = arith.constant 1 : index
    %c0_18 = arith.constant 0 : index
    %17 = vector.load %arg1[%c0_16, %c1_17, %c0_18] : memref<1x82x8xbf16, #tpu.memory_space<vmem>>, vector<1x72x4xbf16>
    %18 = vector.shape_cast %17 : vector<1x72x4xbf16> to vector<72x4xbf16>
    %c0_19 = arith.constant 0 : index
    %c0_20 = arith.constant 0 : index
    %c0_21 = arith.constant 0 : index
    %19 = vector.load %arg4[%c0_19, %c0_20, %c0_21] : memref<3x4x4xbf16, #tpu.memory_space<vmem>>, vector<1x4x4xbf16>
    %20 = vector.shape_cast %19 : vector<1x4x4xbf16> to vector<4x4xbf16>
    %cst_22 = arith.constant dense<0.000000e+00> : vector<72x4xf32>
    %21 = tpu.matmul %18, %20, %cst_22 {dimension_numbers = #tpu.dot_dimension_numbers<[1], [0], [0], [1], [0, 0, 1, 1], [], []>} : vector<72x4xbf16>, vector<4x4xbf16>, vector<72x4xf32> -> vector<72x4xf32>
    %22 = arith.addf %16, %21 : vector<72x4xf32>
    %c0_23 = arith.constant 0 : index
    %c1_24 = arith.constant 1 : index
    %c0_25 = arith.constant 0 : index
    %23 = vector.load %arg2[%c0_23, %c1_24, %c0_25] : memref<1x73x8xbf16, #tpu.memory_space<vmem>>, vector<1x72x4xbf16>
    %24 = vector.shape_cast %23 : vector<1x72x4xbf16> to vector<72x4xbf16>
    %c1_26 = arith.constant 1 : index
    %c0_27 = arith.constant 0 : index
    %c0_28 = arith.constant 0 : index
    %25 = vector.load %arg4[%c1_26, %c0_27, %c0_28] : memref<3x4x4xbf16, #tpu.memory_space<vmem>>, vector<1x4x4xbf16>
    %26 = vector.shape_cast %25 : vector<1x4x4xbf16> to vector<4x4xbf16>
    %cst_29 = arith.constant dense<0.000000e+00> : vector<72x4xf32>
    %27 = tpu.matmul %24, %26, %cst_29 {dimension_numbers = #tpu.dot_dimension_numbers<[1], [0], [0], [1], [0, 0, 1, 1], [], []>} : vector<72x4xbf16>, vector<4x4xbf16>, vector<72x4xf32> -> vector<72x4xf32>
    %28 = arith.addf %22, %27 : vector<72x4xf32>
    %c0_30 = arith.constant 0 : index
    %c10 = arith.constant 10 : index
    %c0_31 = arith.constant 0 : index
    %29 = vector.load %arg1[%c0_30, %c10, %c0_31] : memref<1x82x8xbf16, #tpu.memory_space<vmem>>, vector<1x72x4xbf16>
    %30 = vector.shape_cast %29 : vector<1x72x4xbf16> to vector<72x4xbf16>
    %c2_32 = arith.constant 2 : index
    %c0_33 = arith.constant 0 : index
    %c0_34 = arith.constant 0 : index
    %31 = vector.load %arg4[%c2_32, %c0_33, %c0_34] : memref<3x4x4xbf16, #tpu.memory_space<vmem>>, vector<1x4x4xbf16>
    %32 = vector.shape_cast %31 : vector<1x4x4xbf16> to vector<4x4xbf16>
    %cst_35 = arith.constant dense<0.000000e+00> : vector<72x4xf32>
    %33 = tpu.matmul %30, %32, %cst_35 {dimension_numbers = #tpu.dot_dimension_numbers<[1], [0], [0], [1], [0, 0, 1, 1], [], []>} : vector<72x4xbf16>, vector<4x4xbf16>, vector<72x4xf32> -> vector<72x4xf32>
    %34 = arith.addf %28, %33 : vector<72x4xf32>
    %c0_36 = arith.constant 0 : index
    %c0_37 = arith.constant 0 : index
    %35 = vector.load %arg5[%c0_36, %c0_37] : memref<1x4xf32, #tpu.memory_space<vmem>>, vector<1x4xf32>
    %36 = vector.broadcast %35 : vector<1x4xf32> to vector<72x4xf32>
    %37 = arith.addf %34, %36 : vector<72x4xf32>
    %c0_38 = arith.constant 0 : index
    %c0_39 = arith.constant 0 : index
    %c0_40 = arith.constant 0 : index
    %38 = vector.load %arg6[%c0_38, %c0_39, %c0_40] : memref<1x72x4xf32, #tpu.memory_space<vmem>>, vector<1x72x4xf32>
    %39 = vector.shape_cast %38 : vector<1x72x4xf32> to vector<72x4xf32>
    %40 = vector.shape_cast %37 : vector<72x4xf32> to vector<1x72x4xf32>
    tpu.vector_store %arg6[%c0_38, %c0_39, %c0_40], %40 {strides = array<i32>} : memref<1x72x4xf32, #tpu.memory_space<vmem>>, vector<1x72x4xf32>,
    return
  }
  func.func @transform_0(%arg0: i32) -> (i32, i32, i32) {
    %c0_i32 = arith.constant 0 : i32
    %c0_i32_0 = arith.constant 0 : i32
    %c0_i32_1 = arith.constant 0 : i32
    return %arg0, %c0_i32, %c0_i32_0 : i32, i32, i32
  }
  func.func @transform_1(%arg0: i32) -> (i32, i32, i32) {
    %c0_i32 = arith.constant 0 : i32
    %c0_i32_0 = arith.constant 0 : i32
    %c0_i32_1 = arith.constant 0 : i32
    return %arg0, %c0_i32, %c0_i32_0 : i32, i32, i32
  }
  func.func @transform_2(%arg0: i32) -> (i32, i32, i32) {
    %c0_i32 = arith.constant 0 : i32
    %c0_i32_0 = arith.constant 0 : i32
    %c0_i32_1 = arith.constant 0 : i32
    %c0_i32_2 = arith.constant 0 : i32
    return %c0_i32, %c0_i32_0, %c0_i32_1 : i32, i32, i32
  }
  func.func @transform_3(%arg0: i32) -> (i32, i32, i32) {
    %c0_i32 = arith.constant 0 : i32
    %c0_i32_0 = arith.constant 0 : i32
    %c0_i32_1 = arith.constant 0 : i32
    %c0_i32_2 = arith.constant 0 : i32
    return %c0_i32, %c0_i32_0, %c0_i32_1 : i32, i32, i32
  }
  func.func @transform_4(%arg0: i32) -> (i32, i32) {
    %c0_i32 = arith.constant 0 : i32
    %c0_i32_0 = arith.constant 0 : i32
    %c0_i32_1 = arith.constant 0 : i32
    return %c0_i32, %c0_i32_0 : i32, i32
  }
  func.func @transform_5(%arg0: i32) -> (i32, i32, i32) {
    %c0_i32 = arith.constant 0 : i32
    %c0_i32_0 = arith.constant 0 : i32
    %c0_i32_1 = arith.constant 0 : i32
    return %arg0, %c0_i32, %c0_i32_0 : i32, i32, i32
  }
}

</mosaic_0001>

<llo_original>
// kernel: tpu_custom_call.1
$region0: #{tpu_custom_call.1}
  #allocation0 [shape = 'u32[]', space=smem, size = 0x4, offset = 0x4, fixed_abs, tag = 'smem constant byte address 0x4 - core index']
  #allocation1 [shape = 'u32[144,128]{1,0:T(1,128)}', space=vmem, size = 0x12000, scoped, tag = 'internal scratch']
  %s0 = inlined_call_operand.vmem [shape: bf16[2,82,8], index: 0, kind: input, shape index: {}]
  %s1 = inlined_call_operand.vmem [shape: bf16[2,73,8], index: 1, kind: input, shape index: {}]
  %s2 = inlined_call_operand.vmem [shape: bf16[3,8,4], index: 2, kind: input, shape index: {}]
  %s3 = inlined_call_operand.vmem [shape: bf16[3,4,4], index: 3, kind: input, shape index: {}]
  %s4 = inlined_call_operand.vmem [shape: f32[1,4], index: 4, kind: input, shape index: {}]
  %s5 = inlined_call_operand.vmem [shape: f32[2,72,4], index: 5, kind: output, shape index: {}]
  %s6 = sld [smem:[#allocation0]]
  $region53: #{tpu_custom_call.1} parent=0
    _
  %s8 = ssub.s32 1, %s6
  %s9 = scalar_select 0, %s8, %s6
  loop: start=0, step=1, limit=4
  $region2: #{tpu_custom_call.1} parent=0 // loop_pre_header
    _
  $region3: #{tpu_custom_call.1} parent=0 // loop_header
    %s11 = sphi 0, %s15
    %p12 = scmp.ge.s32.totalorder %s11, 4
    %s21 = sphi 0, %s23
    %s24 = sphi 0, %s21
    %s25 = sphi 0, %s24
    %s41 = sphi 0, %s25
    %s47 = sphi 0, %s49
    %s50 = sphi 0, %s47
    %s51 = sphi 0, %s50
    %s67 = sphi 0, %s51
    %s71 = sphi 0, %s71
    %s73 = sphi 0, %s71
    %s74 = sphi 0, %s73
    %s88 = sphi 0, %s74
    %s92 = sphi 0, %s92
    %s94 = sphi 0, %s92
    %s95 = sphi 0, %s94
    %s109 = sphi 0, %s95
    %s113 = sphi 0, %s113
    %s115 = sphi 0, %s113
    %s116 = sphi 0, %s115
    %s130 = sphi 0, %s116
    %s136 = sphi 0, %s138
    %s139 = sphi 0, %s136
    %s140 = sphi 0, %s139
    %s156 = sphi 0, %s140
  $region4: #{tpu_custom_call.1} parent=0 // loop_header_branch
    %14 = sbr.rel (%p12) target = $region8
  $region5: #{tpu_custom_call.1} parent=0 // loop_body
    %s16 = ssub.s32 %s11, 1
    %s17 = ssub.s32 %s11, 2
    %s18 = sadd.s32 %s11, 1
    %s19 = ssub.s32 %s11, %s18
    %p20 = scmp.eq.s32.totalorder %s19, 0
    %s22 = sadd.s32 %s21, 1
    %s23 = scalar_select %p20, %s21, %s22
    %p26 = pneg %p20
    %p27 = scmp.eq.s32.totalorder %s11, 1
    %p28 = por %p26, %p27
    %p29 = scmp.ne.s32.totalorder %s21, %s24
    %p30 = scmp.eq.s32.totalorder %s11, 0
    %p31 = por %p29, %p30
    %p32 = scmp.ne.s32.totalorder %s21, %s24
    %p33 = scmp.eq.s32.totalorder %s16, 1
    %p34 = por %p32, %p33
    %p35 = scmp.ne.s32.totalorder %s24, %s25
    %p36 = scmp.eq.s32.totalorder %s16, 0
    %p37 = por %p35, %p36
    %p38 = scmp.ne.s32.totalorder %s24, %s25
    %p39 = scmp.eq.s32.totalorder %s17, 1
    %p40 = por %p38, %p39
    %p42 = scmp.ne.s32.totalorder %s25, %s41
    %p43 = scmp.eq.s32.totalorder %s17, 0
    %p44 = por %p42, %p43
    %s45 = ssub.s32 %s11, %s18
    %p46 = scmp.eq.s32.totalorder %s45, 0
    %s48 = sadd.s32 %s47, 1
    %s49 = scalar_select %p46, %s47, %s48
    %p52 = pneg %p46
    %p53 = scmp.eq.s32.totalorder %s11, 1
    %p54 = por %p52, %p53
    %p55 = scmp.ne.s32.totalorder %s47, %s50
    %p56 = scmp.eq.s32.totalorder %s11, 0
    %p57 = por %p55, %p56
    %p58 = scmp.ne.s32.totalorder %s47, %s50
    %p59 = scmp.eq.s32.totalorder %s16, 1
    %p60 = por %p58, %p59
    %p61 = scmp.ne.s32.totalorder %s50, %s51
    %p62 = scmp.eq.s32.totalorder %s16, 0
    %p63 = por %p61, %p62
    %p64 = scmp.ne.s32.totalorder %s50, %s51
    %p65 = scmp.eq.s32.totalorder %s17, 1
    %p66 = por %p64, %p65
    %p68 = scmp.ne.s32.totalorder %s51, %s67
    %p69 = scmp.eq.s32.totalorder %s17, 0
    %p70 = por %p68, %p69
    %s72 = sadd.s32 %s71, 1
    %p75 = scmp.eq.s32.totalorder %s11, 1
    %p76 = scmp.ne.s32.totalorder %s71, %s73
    %p77 = scmp.eq.s32.totalorder %s11, 0
    %p78 = por %p76, %p77
    %p79 = scmp.ne.s32.totalorder %s71, %s73
    %p80 = scmp.eq.s32.totalorder %s16, 1
    %p81 = por %p79, %p80
    %p82 = scmp.ne.s32.totalorder %s73, %s74
    %p83 = scmp.eq.s32.totalorder %s16, 0
    %p84 = por %p82, %p83
    %p85 = scmp.ne.s32.totalorder %s73, %s74
    %p86 = scmp.eq.s32.totalorder %s17, 1
    %p87 = por %p85, %p86
    %p89 = scmp.ne.s32.totalorder %s74, %s88
    %p90 = scmp.eq.s32.totalorder %s17, 0
    %p91 = por %p89, %p90
    %s93 = sadd.s32 %s92, 1
    %p96 = scmp.eq.s32.totalorder %s11, 1
    %p97 = scmp.ne.s32.totalorder %s92, %s94
    %p98 = scmp.eq.s32.totalorder %s11, 0
    %p99 = por %p97, %p98
    %p100 = scmp.ne.s32.totalorder %s92, %s94
    %p101 = scmp.eq.s32.totalorder %s16, 1
    %p102 = por %p100, %p101
    %p103 = scmp.ne.s32.totalorder %s94, %s95
    %p104 = scmp.eq.s32.totalorder %s16, 0
    %p105 = por %p103, %p104
    %p106 = scmp.ne.s32.totalorder %s94, %s95
    %p107 = scmp.eq.s32.totalorder %s17, 1
    %p108 = por %p106, %p107
    %p110 = scmp.ne.s32.totalorder %s95, %s109
    %p111 = scmp.eq.s32.totalorder %s17, 0
    %p112 = por %p110, %p111
    %s114 = sadd.s32 %s113, 1
    %p117 = scmp.eq.s32.totalorder %s11, 1
    %p118 = scmp.ne.s32.totalorder %s113, %s115
    %p119 = scmp.eq.s32.totalorder %s11, 0
    %p120 = por %p118, %p119
    %p121 = scmp.ne.s32.totalorder %s113, %s115
    %p122 = scmp.eq.s32.totalorder %s16, 1
    %p123 = por %p121, %p122
    %p124 = scmp.ne.s32.totalorder %s115, %s116
    %p125 = scmp.eq.s32.totalorder %s16, 0
    %p126 = por %p124, %p125
    %p127 = scmp.ne.s32.totalorder %s115, %s116
    %p128 = scmp.eq.s32.totalorder %s17, 1
    %p129 = por %p127, %p128
    %p131 = scmp.ne.s32.totalorder %s116, %s130
    %p132 = scmp.eq.s32.totalorder %s17, 0
    %p133 = por %p131, %p132
    %s134 = ssub.s32 %s11, %s18
    %p135 = scmp.eq.s32.totalorder %s134, 0
    %s137 = sadd.s32 %s136, 1
    %s138 = scalar_select %p135, %s136, %s137
    %p141 = pneg %p135
    %p142 = scmp.eq.s32.totalorder %s11, 1
    %p143 = por %p141, %p142
    %p144 = scmp.ne.s32.totalorder %s136, %s139
    %p145 = scmp.eq.s32.totalorder %s11, 0
    %p146 = por %p144, %p145
    %p147 = scmp.ne.s32.totalorder %s136, %s139
    %p148 = scmp.eq.s32.totalorder %s16, 1
    %p149 = por %p147, %p148
    %p150 = scmp.ne.s32.totalorder %s139, %s140
    %p151 = scmp.eq.s32.totalorder %s16, 0
    %p152 = por %p150, %p151
    %p153 = scmp.ne.s32.totalorder %s139, %s140
    %p154 = scmp.eq.s32.totalorder %s17, 1
    %p155 = por %p153, %p154
    %p157 = scmp.ne.s32.totalorder %s140, %s156
    %p158 = scmp.eq.s32.totalorder %s17, 0
    %p159 = por %p157, %p158
    %p160 = scmp.le.s32.totalorder 1, %s11
    %p161 = scmp.lt.s32.totalorder %s11, 3
    %p162 = pnand %p160, %p161
    %p163 = pneg %p162
    // Predicated region
    $region9: #{tpu_custom_call.1} parent=5 // pred_check
      _
    $region10: #{tpu_custom_call.1} parent=5 // pred_check_branch
      %165 = sbr.rel (%p162) target = $region12
    $region11: #{tpu_custom_call.1} parent=5 // pred_region
      %s166 = ssub.s32 %s11, 1
      // Predicated region
      $region13: #{tpu_custom_call.1} parent=11 // pred_check
        %p167 = pneg %p84
      $region14: #{tpu_custom_call.1} parent=11 // pred_check_branch
        %169 = sbr.rel (%p167) target = $region16
      $region15: #{tpu_custom_call.1} parent=11 // pred_region
        _
      $region16: #{tpu_custom_call.1} parent=11 // pred_fallthru
        _
      // Predicated region
      $region17: #{tpu_custom_call.1} parent=11 // pred_check
        %p170 = pneg %p105
      $region18: #{tpu_custom_call.1} parent=11 // pred_check_branch
        %172 = sbr.rel (%p170) target = $region20
      $region19: #{tpu_custom_call.1} parent=11 // pred_region
        _
      $region20: #{tpu_custom_call.1} parent=11 // pred_fallthru
        _
      // Predicated region
      $region21: #{tpu_custom_call.1} parent=11 // pred_check
        %p173 = pneg %p126
      $region22: #{tpu_custom_call.1} parent=11 // pred_check_branch
        %175 = sbr.rel (%p173) target = $region24
      $region23: #{tpu_custom_call.1} parent=11 // pred_region
        _
      $region24: #{tpu_custom_call.1} parent=11 // pred_fallthru
        _
    $region12: #{tpu_custom_call.1} parent=5 // pred_fallthru
      _
    %p176 = scmp.lt.s32.totalorder %s11, 2
    // Predicated region
    $region25: #{tpu_custom_call.1} parent=5 // pred_check
      %p177 = pneg %p176
    $region26: #{tpu_custom_call.1} parent=5 // pred_check_branch
      %179 = sbr.rel (%p177) target = $region28
    $region27: #{tpu_custom_call.1} parent=5 // pred_region
      // Predicated region
      $region29: #{tpu_custom_call.1} parent=27 // pred_check
        %p180 = pneg %p31
      $region30: #{tpu_custom_call.1} parent=27 // pred_check_branch
        %182 = sbr.rel (%p180) target = $region32
      $region31: #{tpu_custom_call.1} parent=27 // pred_region
        %p183 = scmp.lt.s32.totalorder %s11, 1
        %s184 = scalar_select %p183, %s11, 1
        %s185 = smul.addr %s184, 11
        %s186 = smul.addr %s185, 4
        %s187 = scalar_lea.vmem %s0, %s186
      $region32: #{tpu_custom_call.1} parent=27 // pred_fallthru
        _
      // Predicated region
      $region33: #{tpu_custom_call.1} parent=27 // pred_check
        %p188 = pneg %p57
      $region34: #{tpu_custom_call.1} parent=27 // pred_check_branch
        %190 = sbr.rel (%p188) target = $region36
      $region35: #{tpu_custom_call.1} parent=27 // pred_region
        %p191 = scmp.lt.s32.totalorder %s11, 1
        %s192 = scalar_select %p191, %s11, 1
        %s193 = smul.addr %s192, 10
        %s194 = smul.addr %s193, 4
        %s195 = scalar_lea.vmem %s1, %s194
      $region36: #{tpu_custom_call.1} parent=27 // pred_fallthru
        _
    $region28: #{tpu_custom_call.1} parent=5 // pred_fallthru
      _
    %p196 = scmp.le.s32.totalorder 1, %s11
    %p197 = scmp.lt.s32.totalorder %s11, 3
    %p198 = pnand %p196, %p197
    %p199 = pneg %p198
    // Predicated region
    $region37: #{tpu_custom_call.1} parent=5 // pred_check
      _
    $region38: #{tpu_custom_call.1} parent=5 // pred_check_branch
      %201 = sbr.rel (%p198) target = $region40
    $region39: #{tpu_custom_call.1} parent=5 // pred_region
      %s202 = ssub.s32 %s11, 1
      %p203 = scmp.lt.s32.totalorder %s16, 1
      %s204 = scalar_select %p203, %s16, 1
      %s205 = smul.addr %s204, 11
      %s206 = smul.addr %s205, 4
      %s207 = scalar_lea.vmem %s0, %s206
      %p208 = pneg %p37
      %p209 = pneg %p34
      %p210 = scmp.lt.s32.totalorder %s16, 1
      %s211 = scalar_select %p210, %s16, 1
      %s212 = smul.addr %s211, 10
      %s213 = smul.addr %s212, 4
      %s214 = scalar_lea.vmem %s1, %s213
      %p215 = pneg %p63
      %p216 = pneg %p60
      %p217 = pneg %p84
      %p218 = pneg %p81
      %p219 = pneg %p105
      %p220 = pneg %p102
      %p221 = pneg %p126
      %p222 = pneg %p123
      %p223 = pneg %p152
      %p224 = pneg %p149
      %p225 = scmp.lt.s32.totalorder %s16, 1
      %s226 = scalar_select %p225, %s16, 1
      %s227 = smul.addr %s226, 9
      %s228 = smul.addr %s227, 8
      %s229 = scalar_lea.vmem %s5, %s228
      %p230 = scmp.lt.s32.totalorder %s16, 1
      %s231 = scalar_select %p230, %s16, 1
      %s232 = smul.addr %s231, 11
      %s233 = smul.addr %s232, 4
      %s234 = scalar_lea.vmem %s0, %s233
      %p235 = scmp.lt.s32.totalorder %s16, 1
      %s236 = scalar_select %p235, %s16, 1
      %s237 = smul.addr %s236, 10
      %s238 = smul.addr %s237, 4
      %s239 = scalar_lea.vmem %s1, %s238
      %p240 = scmp.lt.s32.totalorder %s16, 1
      %s241 = scalar_select %p240, %s16, 1
      %s242 = smul.addr %s241, 9
      %s243 = smul.addr %s242, 8
      %s244 = scalar_lea.vmem %s5, %s243
      %v246 = vld [vmem:[%s234] sm:$0xf]
      %v247 = vld [vmem:[%s234 + $0x4] sm:$0xf]
      %v248 = vld [vmem:[%s234 + $0x8] sm:$0xf]
      %v249 = vld [vmem:[%s234 + $0xc] sm:$0xf]
      %v250 = vld [vmem:[%s234 + $0x10] sm:$0xf]
      %v251 = vld [vmem:[%s234 + $0x14] sm:$0xf]
      %v252 = vld [vmem:[%s234 + $0x18] sm:$0xf]
      %v253 = vld [vmem:[%s234 + $0x1c] sm:$0xf]
      %v254 = vld [vmem:[%s234 + $0x20] sm:$0xf]
      %v255 = vld [vmem:[%s2] sm:$0xf]
      %v256 = vld [vmem:[%s239] sm:$0xf]
      %v257 = vld [vmem:[%s239 + $0x4] sm:$0xf]
      %v258 = vld [vmem:[%s239 + $0x8] sm:$0xf]
      %v259 = vld [vmem:[%s239 + $0xc] sm:$0xf]
      %v260 = vld [vmem:[%s239 + $0x10] sm:$0xf]
      %v261 = vld [vmem:[%s239 + $0x14] sm:$0xf]
      %v262 = vld [vmem:[%s239 + $0x18] sm:$0xf]
      %v263 = vld [vmem:[%s239 + $0x1c] sm:$0xf]
      %v264 = vld [vmem:[%s239 + $0x20] sm:$0xf]
      %s265 = scalar_lea.vmem %s2, 4
      %v266 = vld [vmem:[%s265] sm:$0xf]
      %v276 = vunpack.c.l.b16 %v256
      %v277 = vunpack.c.l.b16 %v257
      %v278 = vunpack.c.l.b16 %v258
      %v279 = vunpack.c.l.b16 %v259
      %v280 = vunpack.c.l.b16 %v260
      %v281 = vunpack.c.l.b16 %v261
      %v282 = vunpack.c.l.b16 %v262
      %v283 = vunpack.c.l.b16 %v263
      %v284 = vunpack.c.l.b16 %v264
      %v285 = vpack.c.b16 %v277, %v276
      %v286 = vpack.c.b16 %v279, %v278
      %v287 = vpack.c.b16 %v281, %v280
      %v288 = vpack.c.b16 %v283, %v282
      %v289 = vpack.c.b16 %v284, %v284
      %vm290 = vcmask 64512
      %v292 = vsel %vm290, %v285, 0
      %v295 = vsel %vm290, %v286, 0
      %v298 = vsel %vm290, %v287, 0
      %v301 = vsel %vm290, %v288, 0
      %v304 = vsel %vm290, %v289, 0
      %vm306 = vcmask 1043456
      %v308 = vsel %vm306, %v266, 0
      %310 = vmatprep.subr.bf16.mxu0 0
      %311 = vmatpush1.bf16.msra.mxu0 %v308
      %312 = vmatprep.subr.bf16.mxu0 0
      %313 = vmatpush1.bf16.msra.mxu0 0
      %314 = vmatprep.subr.bf16.mxu0 0
      %315 = vmatpush1.bf16.msra.mxu0 0
      %316 = vmatprep.subr.bf16.mxu0 0
      %317 = vmatpush1.bf16.msra.mxu0 0
      %318 = vmatprep.subr.bf16.mxu0 0
      %319 = vmatpush1.bf16.msra.mxu0 0
      %320 = vmatprep.subr.bf16.mxu0 0
      %321 = vmatpush1.bf16.msra.mxu0 0
      %322 = vmatprep.subr.bf16.mxu0 0
      %323 = vmatpush1.bf16.msra.mxu0 0
      %324 = vmatprep.subr.bf16.mxu0 0
      %325 = vmatpush1.bf16.msra.mxu0 0
      %326 = vmatprep.subr.bf16.mxu0 0
      %327 = vmatpush1.bf16.msra.mxu0 0
      %328 = vmatprep.subr.bf16.mxu0 0
      %329 = vmatpush1.bf16.msra.mxu0 0
      %330 = vmatprep.subr.bf16.mxu0 0
      %331 = vmatpush1.bf16.msra.mxu0 0
      %332 = vmatprep.subr.bf16.mxu0 0
      %333 = vmatpush1.bf16.msra.mxu0 0
      %334 = vmatprep.subr.bf16.mxu0 0
      %335 = vmatpush1.bf16.msra.mxu0 0
      %336 = vmatprep.subr.bf16.mxu0 0
      %337 = vmatpush1.bf16.msra.mxu0 0
      %338 = vmatprep.subr.bf16.mxu0 0
      %339 = vmatpush1.bf16.msra.mxu0 0
      %340 = vmatprep.subr.bf16.mxu0 0
      %341 = vmatpush1.bf16.msra.mxu0 0
      %342 = vmatprep.mubr.bf16.mxu0 0
      %343 = vmatmul.mubr.bf16.gmra.mrb[0].mxu0 %v292
      %v344 = vpop.f32.mrb[0].mxu0
      %v345 = vadd.f32 0.0, %v344
      %v346 = vpop.f32.mrb[0].mxu0
      %v347 = vpop.f32.mrb[0].mxu0
      %v348 = vadd.f32 0.0, %v347
      %v349 = vpop.f32.mrb[0].mxu0
      %350 = vmatprep.mubr.bf16.mxu0 0
      %351 = vmatmul.mubr.bf16.gmra.mrb[0].mxu0 %v295
      %v352 = vpop.f32.mrb[0].mxu0
      %v353 = vadd.f32 0.0, %v352
      %v354 = vpop.f32.mrb[0].mxu0
      %v355 = vpop.f32.mrb[0].mxu0
      %v356 = vadd.f32 0.0, %v355
      %v357 = vpop.f32.mrb[0].mxu0
      %358 = vmatprep.mubr.bf16.mxu0 0
      %359 = vmatmul.mubr.bf16.gmra.mrb[0].mxu0 %v298
      %v360 = vpop.f32.mrb[0].mxu0
      %v361 = vadd.f32 0.0, %v360
      %v362 = vpop.f32.mrb[0].mxu0
      %v363 = vpop.f32.mrb[0].mxu0
      %v364 = vadd.f32 0.0, %v363
      %v365 = vpop.f32.mrb[0].mxu0
      %366 = vmatprep.mubr.bf16.mxu0 0
      %367 = vmatmul.mubr.bf16.gmra.mrb[0].mxu0 %v301
      %v368 = vpop.f32.mrb[0].mxu0
      %v369 = vadd.f32 0.0, %v368
      %v370 = vpop.f32.mrb[0].mxu0
      %v371 = vpop.f32.mrb[0].mxu0
      %v372 = vadd.f32 0.0, %v371
      %v373 = vpop.f32.mrb[0].mxu0
      %374 = vmatprep.mubr.bf16.mxu0 0
      %375 = vmatmul.mubr.bf16.gmra.mrb[0].mxu0 %v304
      %v376 = vpop.f32.mrb[0].mxu0
      %v377 = vadd.f32 0.0, %v376
      %v378 = vpop.f32.mrb[0].mxu0
      %v379 = vpop.f32.mrb[0].mxu0
      %v380 = vpop.f32.mrb[0].mxu0
      %381 = vdwg.mxu0
      %v391 = vunpack.c.l.b16 %v246
      %v392 = vunpack.c.l.b16 %v247
      %v393 = vunpack.c.l.b16 %v248
      %v394 = vunpack.c.l.b16 %v249
      %v395 = vunpack.c.l.b16 %v250
      %v396 = vunpack.c.l.b16 %v251
      %v397 = vunpack.c.l.b16 %v252
      %v398 = vunpack.c.l.b16 %v253
      %v399 = vunpack.c.l.b16 %v254
      %v400 = vpack.c.b16 %v392, %v391
      %v401 = vpack.c.b16 %v394, %v393
      %v402 = vpack.c.b16 %v396, %v395
      %v403 = vpack.c.b16 %v398, %v397
      %v404 = vpack.c.b16 %v399, %v399
      %v406 = vsel %vm290, %v400, 0
      %v409 = vsel %vm290, %v401, 0
      %v412 = vsel %vm290, %v402, 0
      %v415 = vsel %vm290, %v403, 0
      %v418 = vsel %vm290, %v404, 0
      %v421 = vsel %vm306, %v255, 0
      %423 = vmatprep.subr.bf16.mxu0 0
      %424 = vmatpush1.bf16.msra.mxu0 %v421
      %425 = vmatprep.subr.bf16.mxu0 0
      %426 = vmatpush1.bf16.msra.mxu0 0
      %427 = vmatprep.subr.bf16.mxu0 0
      %428 = vmatpush1.bf16.msra.mxu0 0
      %429 = vmatprep.subr.bf16.mxu0 0
      %430 = vmatpush1.bf16.msra.mxu0 0
      %431 = vmatprep.subr.bf16.mxu0 0
      %432 = vmatpush1.bf16.msra.mxu0 0
      %433 = vmatprep.subr.bf16.mxu0 0
      %434 = vmatpush1.bf16.msra.mxu0 0
      %435 = vmatprep.subr.bf16.mxu0 0
      %436 = vmatpush1.bf16.msra.mxu0 0
      %437 = vmatprep.subr.bf16.mxu0 0
      %438 = vmatpush1.bf16.msra.mxu0 0
      %439 = vmatprep.subr.bf16.mxu0 0
      %440 = vmatpush1.bf16.msra.mxu0 0
      %441 = vmatprep.subr.bf16.mxu0 0
      %442 = vmatpush1.bf16.msra.mxu0 0
      %443 = vmatprep.subr.bf16.mxu0 0
      %444 = vmatpush1.bf16.msra.mxu0 0
      %445 = vmatprep.subr.bf16.mxu0 0
      %446 = vmatpush1.bf16.msra.mxu0 0
      %447 = vmatprep.subr.bf16.mxu0 0
      %448 = vmatpush1.bf16.msra.mxu0 0
      %449 = vmatprep.subr.bf16.mxu0 0
      %450 = vmatpush1.bf16.msra.mxu0 0
      %451 = vmatprep.subr.bf16.mxu0 0
      %452 = vmatpush1.bf16.msra.mxu0 0
      %453 = vmatprep.subr.bf16.mxu0 0
      %454 = vmatpush1.bf16.msra.mxu0 0
      %455 = vmatprep.mubr.bf16.mxu0 0
      %456 = vmatmul.mubr.bf16.gmra.mrb[0].mxu0 %v406
      %v457 = vpop.f32.mrb[0].mxu0
      %v458 = vadd.f32 %v345, %v457
      %v459 = vpop.f32.mrb[0].mxu0
      %v460 = vpop.f32.mrb[0].mxu0
      %v461 = vadd.f32 %v348, %v460
      %v462 = vpop.f32.mrb[0].mxu0
      %463 = vmatprep.mubr.bf16.mxu0 0
      %464 = vmatmul.mubr.bf16.gmra.mrb[0].mxu0 %v409
      %v465 = vpop.f32.mrb[0].mxu0
      %v466 = vadd.f32 %v353, %v465
      %v467 = vpop.f32.mrb[0].mxu0
      %v468 = vpop.f32.mrb[0].mxu0
      %v469 = vadd.f32 %v356, %v468
      %v470 = vpop.f32.mrb[0].mxu0
      %471 = vmatprep.mubr.bf16.mxu0 0
      %472 = vmatmul.mubr.bf16.gmra.mrb[0].mxu0 %v412
      %v473 = vpop.f32.mrb[0].mxu0
      %v474 = vadd.f32 %v361, %v473
      %v475 = vpop.f32.mrb[0].mxu0
      %v476 = vpop.f32.mrb[0].mxu0
      %v477 = vadd.f32 %v364, %v476
      %v478 = vpop.f32.mrb[0].mxu0
      %479 = vmatprep.mubr.bf16.mxu0 0
      %480 = vmatmul.mubr.bf16.gmra.mrb[0].mxu0 %v415
      %v481 = vpop.f32.mrb[0].mxu0
      %v482 = vadd.f32 %v369, %v481
      %v483 = vpop.f32.mrb[0].mxu0
      %v484 = vpop.f32.mrb[0].mxu0
      %v485 = vadd.f32 %v372, %v484
      %v486 = vpop.f32.mrb[0].mxu0
      %487 = vmatprep.mubr.bf16.mxu0 0
      %488 = vmatmul.mubr.bf16.gmra.mrb[0].mxu0 %v418
      %v489 = vpop.f32.mrb[0].mxu0
      %v490 = vadd.f32 %v377, %v489
      %v491 = vpop.f32.mrb[0].mxu0
      %v492 = vpop.f32.mrb[0].mxu0
      %v493 = vpop.f32.mrb[0].mxu0
      %494 = vdwg.mxu0
      %v495 = vld [vmem:[%s234 + $0x4] sm:$0xf]
      %v496 = vld [vmem:[%s234 + $0x8] sm:$0xf]
      %v497 = vld [vmem:[%s234 + $0xc] sm:$0xf]
      %v498 = vld [vmem:[%s234 + $0x10] sm:$0xf]
      %v499 = vld [vmem:[%s234 + $0x14] sm:$0xf]
      %v500 = vld [vmem:[%s234 + $0x18] sm:$0xf]
      %v501 = vld [vmem:[%s234 + $0x1c] sm:$0xf]
      %v502 = vld [vmem:[%s234 + $0x20] sm:$0xf]
      %v503 = vld [vmem:[%s234 + $0x24] sm:$0xf]
      %v504 = vld [vmem:[%s234 + $0x28] sm:$0x1]
      %s505 = scalar_lea.vmem %s2, 8
      %v506 = vld [vmem:[%s505] sm:$0xf]
      %v517 = vunpack.c.l.b16 %v495
      %v518 = vunpack.c.l.b16 %v496
      %v519 = vunpack.c.l.b16 %v497
      %v520 = vunpack.c.l.b16 %v498
      %v521 = vunpack.c.l.b16 %v499
      %v522 = vunpack.c.l.b16 %v500
      %v523 = vunpack.c.l.b16 %v501
      %v524 = vunpack.c.l.b16 %v502
      %v525 = vunpack.c.l.b16 %v503
      %v526 = vunpack.c.l.b16 %v504
      %v527 = vpack.c.b16 %v518, %v517
      %v528 = vpack.c.b16 %v520, %v519
      %v529 = vpack.c.b16 %v522, %v521
      %v530 = vpack.c.b16 %v524, %v523
      %v531 = vpack.c.b16 %v526, %v525
      %vm532 = vsmask.f32 7424
      %v534 = vshrl.u32 %v527, 16
      %v536 = vshll.u32 %v527, 16
      %v538 = vrot.slane %v536, 1
      %v539 = vor.u32 %v534, %v538
      %v541 = vshll.u32 %v528, 16
      %v543 = vrot.slane %v541, 1
      %v544 = vsel %vm532, %v539, %v543
      %v545 = vshrl.u32 %v528, 16
      %v547 = vor.u32 %v545, %v543
      %v549 = vshll.u32 %v529, 16
      %v551 = vrot.slane %v549, 1
      %v552 = vsel %vm532, %v547, %v551
      %v553 = vshrl.u32 %v529, 16
      %v555 = vor.u32 %v553, %v551
      %v557 = vshll.u32 %v530, 16
      %v559 = vrot.slane %v557, 1
      %v560 = vsel %vm532, %v555, %v559
      %v561 = vshrl.u32 %v530, 16
      %v563 = vor.u32 %v561, %v559
      %v565 = vshll.u32 %v531, 16
      %v567 = vrot.slane %v565, 1
      %v568 = vsel %vm532, %v563, %v567
      %v569 = vshrl.u32 %v531, 16
      %v571 = vor.u32 %v569, %v567
      %v573 = vsel %vm290, %v544, 0
      %v576 = vsel %vm290, %v552, 0
      %v579 = vsel %vm290, %v560, 0
      %v582 = vsel %vm290, %v568, 0
      %v585 = vsel %vm290, %v571, 0
      %v588 = vsel %vm306, %v506, 0
      %590 = vmatprep.subr.bf16.mxu0 0
      %591 = vmatpush1.bf16.msra.mxu0 %v588
      %592 = vmatprep.subr.bf16.mxu0 0
      %593 = vmatpush1.bf16.msra.mxu0 0
      %594 = vmatprep.subr.bf16.mxu0 0
      %595 = vmatpush1.bf16.msra.mxu0 0
      %596 = vmatprep.subr.bf16.mxu0 0
      %597 = vmatpush1.bf16.msra.mxu0 0
      %598 = vmatprep.subr.bf16.mxu0 0
      %599 = vmatpush1.bf16.msra.mxu0 0
      %600 = vmatprep.subr.bf16.mxu0 0
      %601 = vmatpush1.bf16.msra.mxu0 0
      %602 = vmatprep.subr.bf16.mxu0 0
      %603 = vmatpush1.bf16.msra.mxu0 0
      %604 = vmatprep.subr.bf16.mxu0 0
      %605 = vmatpush1.bf16.msra.mxu0 0
      %606 = vmatprep.subr.bf16.mxu0 0
      %607 = vmatpush1.bf16.msra.mxu0 0
      %608 = vmatprep.subr.bf16.mxu0 0
      %609 = vmatpush1.bf16.msra.mxu0 0
      %610 = vmatprep.subr.bf16.mxu0 0
      %611 = vmatpush1.bf16.msra.mxu0 0
      %612 = vmatprep.subr.bf16.mxu0 0
      %613 = vmatpush1.bf16.msra.mxu0 0
      %614 = vmatprep.subr.bf16.mxu0 0
      %615 = vmatpush1.bf16.msra.mxu0 0
      %616 = vmatprep.subr.bf16.mxu0 0
      %617 = vmatpush1.bf16.msra.mxu0 0
      %618 = vmatprep.subr.bf16.mxu0 0
      %619 = vmatpush1.bf16.msra.mxu0 0
      %620 = vmatprep.subr.bf16.mxu0 0
      %621 = vmatpush1.bf16.msra.mxu0 0
      %622 = vmatprep.mubr.bf16.mxu0 0
      %623 = vmatmul.mubr.bf16.gmra.mrb[0].mxu0 %v573
      %v624 = vpop.f32.mrb[0].mxu0
      %v625 = vadd.f32 0.0, %v624
      %v626 = vpop.f32.mrb[0].mxu0
      %v627 = vpop.f32.mrb[0].mxu0
      %v628 = vadd.f32 0.0, %v627
      %v629 = vpop.f32.mrb[0].mxu0
      %630 = vmatprep.mubr.bf16.mxu0 0
      %631 = vmatmul.mubr.bf16.gmra.mrb[0].mxu0 %v576
      %v632 = vpop.f32.mrb[0].mxu0
      %v633 = vadd.f32 0.0, %v632
      %v634 = vpop.f32.mrb[0].mxu0
      %v635 = vpop.f32.mrb[0].mxu0
      %v636 = vadd.f32 0.0, %v635
      %v637 = vpop.f32.mrb[0].mxu0
      %638 = vmatprep.mubr.bf16.mxu0 0
      %639 = vmatmul.mubr.bf16.gmra.mrb[0].mxu0 %v579
      %v640 = vpop.f32.mrb[0].mxu0
      %v641 = vadd.f32 0.0, %v640
      %v642 = vpop.f32.mrb[0].mxu0
      %v643 = vpop.f32.mrb[0].mxu0
      %v644 = vadd.f32 0.0, %v643
      %v645 = vpop.f32.mrb[0].mxu0
      %646 = vmatprep.mubr.bf16.mxu0 0
      %647 = vmatmul.mubr.bf16.gmra.mrb[0].mxu0 %v582
      %v648 = vpop.f32.mrb[0].mxu0
      %v649 = vadd.f32 0.0, %v648
      %v650 = vpop.f32.mrb[0].mxu0
      %v651 = vpop.f32.mrb[0].mxu0
      %v652 = vadd.f32 0.0, %v651
      %v653 = vpop.f32.mrb[0].mxu0
      %654 = vmatprep.mubr.bf16.mxu0 0
      %655 = vmatmul.mubr.bf16.gmra.mrb[0].mxu0 %v585
      %v656 = vpop.f32.mrb[0].mxu0
      %v657 = vadd.f32 0.0, %v656
      %v658 = vpop.f32.mrb[0].mxu0
      %v659 = vpop.f32.mrb[0].mxu0
      %v660 = vpop.f32.mrb[0].mxu0
      %661 = vdwg.mxu0
      %v662 = vadd.f32 %v458, %v625
      %v663 = vadd.f32 %v461, %v628
      %v664 = vadd.f32 %v466, %v633
      %v665 = vadd.f32 %v469, %v636
      %v666 = vadd.f32 %v474, %v641
      %v667 = vadd.f32 %v477, %v644
      %v668 = vadd.f32 %v482, %v649
      %v669 = vadd.f32 %v485, %v652
      %v670 = vadd.f32 %v490, %v657
      %v671 = vld [vmem:[%s234] sm:$0xf]
      %v672 = vld [vmem:[%s234 + $0x4] sm:$0xf]
      %v673 = vld [vmem:[%s234 + $0x8] sm:$0xf]
      %v674 = vld [vmem:[%s234 + $0xc] sm:$0xf]
      %v675 = vld [vmem:[%s234 + $0x10] sm:$0xf]
      %v676 = vld [vmem:[%s234 + $0x14] sm:$0xf]
      %v677 = vld [vmem:[%s234 + $0x18] sm:$0xf]
      %v678 = vld [vmem:[%s234 + $0x1c] sm:$0xf]
      %v679 = vld [vmem:[%s234 + $0x20] sm:$0xf]
      %v680 = vld [vmem:[%s234 + $0x24] sm:$0x1]
      %v681 = vld [vmem:[%s3] sm:$0x3]
      %v692 = vunpack.c.l.b16 %v671
      %v693 = vunpack.c.l.b16 %v672
      %v694 = vunpack.c.l.b16 %v673
      %v695 = vunpack.c.l.b16 %v674
      %v696 = vunpack.c.l.b16 %v675
      %v697 = vunpack.c.l.b16 %v676
      %v698 = vunpack.c.l.b16 %v677
      %v699 = vunpack.c.l.b16 %v678
      %v700 = vunpack.c.l.b16 %v679
      %v701 = vunpack.c.l.b16 %v680
      %v702 = vpack.c.b16 %v693, %v692
      %v703 = vpack.c.b16 %v695, %v694
      %v704 = vpack.c.b16 %v697, %v696
      %v705 = vpack.c.b16 %v699, %v698
      %v706 = vpack.c.b16 %v701, %v700
      %v708 = vshrl.u32 %v702, 16
      %v710 = vshll.u32 %v702, 16
      %v712 = vrot.slane %v710, 1
      %v713 = vor.u32 %v708, %v712
      %v715 = vshll.u32 %v703, 16
      %v717 = vrot.slane %v715, 1
      %v718 = vsel %vm532, %v713, %v717
      %v719 = vshrl.u32 %v703, 16
      %v721 = vor.u32 %v719, %v717
      %v723 = vshll.u32 %v704, 16
      %v725 = vrot.slane %v723, 1
      %v726 = vsel %vm532, %v721, %v725
      %v727 = vshrl.u32 %v704, 16
      %v729 = vor.u32 %v727, %v725
      %v731 = vshll.u32 %v705, 16
      %v733 = vrot.slane %v731, 1
      %v734 = vsel %vm532, %v729, %v733
      %v735 = vshrl.u32 %v705, 16
      %v737 = vor.u32 %v735, %v733
      %v739 = vshll.u32 %v706, 16
      %v741 = vrot.slane %v739, 1
      %v742 = vsel %vm532, %v737, %v741
      %v743 = vshrl.u32 %v706, 16
      %v745 = vor.u32 %v743, %v741
      %vm746 = vcmask 31744
      %v748 = vsel %vm746, %v718, 0
      %v751 = vsel %vm746, %v726, 0
      %v754 = vsel %vm746, %v734, 0
      %v757 = vsel %vm746, %v742, 0
      %v760 = vsel %vm746, %v745, 0
      %vm762 = vcmask 1041408
      %v764 = vsel %vm762, %v681, 0
      %766 = vmatprep.subr.bf16.mxu0 0
      %767 = vmatpush1.bf16.msra.mxu0 %v764
      %768 = vmatprep.subr.bf16.mxu0 0
      %769 = vmatpush1.bf16.msra.mxu0 0
      %770 = vmatprep.subr.bf16.mxu0 0
      %771 = vmatpush1.bf16.msra.mxu0 0
      %772 = vmatprep.subr.bf16.mxu0 0
      %773 = vmatpush1.bf16.msra.mxu0 0
      %774 = vmatprep.subr.bf16.mxu0 0
      %775 = vmatpush1.bf16.msra.mxu0 0
      %776 = vmatprep.subr.bf16.mxu0 0
      %777 = vmatpush1.bf16.msra.mxu0 0
      %778 = vmatprep.subr.bf16.mxu0 0
      %779 = vmatpush1.bf16.msra.mxu0 0
      %780 = vmatprep.subr.bf16.mxu0 0
      %781 = vmatpush1.bf16.msra.mxu0 0
      %782 = vmatprep.subr.bf16.mxu0 0
      %783 = vmatpush1.bf16.msra.mxu0 0
      %784 = vmatprep.subr.bf16.mxu0 0
      %785 = vmatpush1.bf16.msra.mxu0 0
      %786 = vmatprep.subr.bf16.mxu0 0
      %787 = vmatpush1.bf16.msra.mxu0 0
      %788 = vmatprep.subr.bf16.mxu0 0
      %789 = vmatpush1.bf16.msra.mxu0 0
      %790 = vmatprep.subr.bf16.mxu0 0
      %791 = vmatpush1.bf16.msra.mxu0 0
      %792 = vmatprep.subr.bf16.mxu0 0
      %793 = vmatpush1.bf16.msra.mxu0 0
      %794 = vmatprep.subr.bf16.mxu0 0
      %795 = vmatpush1.bf16.msra.mxu0 0
      %796 = vmatprep.subr.bf16.mxu0 0
      %797 = vmatpush1.bf16.msra.mxu0 0
      %798 = vmatprep.mubr.bf16.mxu0 0
      %799 = vmatmul.mubr.bf16.gmra.mrb[0].mxu0 %v748
      %v800 = vpop.f32.mrb[0].mxu0
      %v801 = vadd.f32 0.0, %v800
      %v802 = vpop.f32.mrb[0].mxu0
      %v803 = vpop.f32.mrb[0].mxu0
      %v804 = vadd.f32 0.0, %v803
      %v805 = vpop.f32.mrb[0].mxu0
      %806 = vmatprep.mubr.bf16.mxu0 0
      %807 = vmatmul.mubr.bf16.gmra.mrb[0].mxu0 %v751
      %v808 = vpop.f32.mrb[0].mxu0
      %v809 = vadd.f32 0.0, %v808
      %v810 = vpop.f32.mrb[0].mxu0
      %v811 = vpop.f32.mrb[0].mxu0
      %v812 = vadd.f32 0.0, %v811
      %v813 = vpop.f32.mrb[0].mxu0
      %814 = vmatprep.mubr.bf16.mxu0 0
      %815 = vmatmul.mubr.bf16.gmra.mrb[0].mxu0 %v754
      %v816 = vpop.f32.mrb[0].mxu0
      %v817 = vadd.f32 0.0, %v816
      %v818 = vpop.f32.mrb[0].mxu0
      %v819 = vpop.f32.mrb[0].mxu0
      %v820 = vadd.f32 0.0, %v819
      %v821 = vpop.f32.mrb[0].mxu0
      %822 = vmatprep.mubr.bf16.mxu0 0
      %823 = vmatmul.mubr.bf16.gmra.mrb[0].mxu0 %v757
      %v824 = vpop.f32.mrb[0].mxu0
      %v825 = vadd.f32 0.0, %v824
      %v826 = vpop.f32.mrb[0].mxu0
      %v827 = vpop.f32.mrb[0].mxu0
      %v828 = vadd.f32 0.0, %v827
      %v829 = vpop.f32.mrb[0].mxu0
      %830 = vmatprep.mubr.bf16.mxu0 0
      %831 = vmatmul.mubr.bf16.gmra.mrb[0].mxu0 %v760
      %v832 = vpop.f32.mrb[0].mxu0
      %v833 = vadd.f32 0.0, %v832
      %v834 = vpop.f32.mrb[0].mxu0
      %v835 = vpop.f32.mrb[0].mxu0
      %v836 = vpop.f32.mrb[0].mxu0
      %837 = vdwg.mxu0
      %v838 = vadd.f32 %v662, %v801
      %v839 = vadd.f32 %v663, %v804
      %v840 = vadd.f32 %v664, %v809
      %v841 = vadd.f32 %v665, %v812
      %v842 = vadd.f32 %v666, %v817
      %v843 = vadd.f32 %v667, %v820
      %v844 = vadd.f32 %v668, %v825
      %v845 = vadd.f32 %v669, %v828
      %v846 = vadd.f32 %v670, %v833
      %v847 = vld [vmem:[%s239] sm:$0xf]
      %v848 = vld [vmem:[%s239 + $0x4] sm:$0xf]
      %v849 = vld [vmem:[%s239 + $0x8] sm:$0xf]
      %v850 = vld [vmem:[%s239 + $0xc] sm:$0xf]
      %v851 = vld [vmem:[%s239 + $0x10] sm:$0xf]
      %v852 = vld [vmem:[%s239 + $0x14] sm:$0xf]
      %v853 = vld [vmem:[%s239 + $0x18] sm:$0xf]
      %v854 = vld [vmem:[%s239 + $0x1c] sm:$0xf]
      %v855 = vld [vmem:[%s239 + $0x20] sm:$0xf]
      %v856 = vld [vmem:[%s239 + $0x24] sm:$0x1]
      %s857 = scalar_lea.vmem %s3, 2
      %v858 = vld [vmem:[%s857] sm:$0x3]
      %v869 = vunpack.c.l.b16 %v847
      %v870 = vunpack.c.l.b16 %v848
      %v871 = vunpack.c.l.b16 %v849
      %v872 = vunpack.c.l.b16 %v850
      %v873 = vunpack.c.l.b16 %v851
      %v874 = vunpack.c.l.b16 %v852
      %v875 = vunpack.c.l.b16 %v853
      %v876 = vunpack.c.l.b16 %v854
      %v877 = vunpack.c.l.b16 %v855
      %v878 = vunpack.c.l.b16 %v856
      %v879 = vpack.c.b16 %v870, %v869
      %v880 = vpack.c.b16 %v872, %v871
      %v881 = vpack.c.b16 %v874, %v873
      %v882 = vpack.c.b16 %v876, %v875
      %v883 = vpack.c.b16 %v878, %v877
      %v885 = vshrl.u32 %v879, 16
      %v887 = vshll.u32 %v879, 16
      %v889 = vrot.slane %v887, 1
      %v890 = vor.u32 %v885, %v889
      %v892 = vshll.u32 %v880, 16
      %v894 = vrot.slane %v892, 1
      %v895 = vsel %vm532, %v890, %v894
      %v896 = vshrl.u32 %v880, 16
      %v898 = vor.u32 %v896, %v894
      %v900 = vshll.u32 %v881, 16
      %v902 = vrot.slane %v900, 1
      %v903 = vsel %vm532, %v898, %v902
      %v904 = vshrl.u32 %v881, 16
      %v906 = vor.u32 %v904, %v902
      %v908 = vshll.u32 %v882, 16
      %v910 = vrot.slane %v908, 1
      %v911 = vsel %vm532, %v906, %v910
      %v912 = vshrl.u32 %v882, 16
      %v914 = vor.u32 %v912, %v910
      %v916 = vshll.u32 %v883, 16
      %v918 = vrot.slane %v916, 1
      %v919 = vsel %vm532, %v914, %v918
      %v920 = vshrl.u32 %v883, 16
      %v922 = vor.u32 %v920, %v918
      %v924 = vsel %vm746, %v895, 0
      %v927 = vsel %vm746, %v903, 0
      %v930 = vsel %vm746, %v911, 0
      %v933 = vsel %vm746, %v919, 0
      %v936 = vsel %vm746, %v922, 0
      %v939 = vsel %vm762, %v858, 0
      %941 = vmatprep.subr.bf16.mxu0 0
      %942 = vmatpush1.bf16.msra.mxu0 %v939
      %943 = vmatprep.subr.bf16.mxu0 0
      %944 = vmatpush1.bf16.msra.mxu0 0
      %945 = vmatprep.subr.bf16.mxu0 0
      %946 = vmatpush1.bf16.msra.mxu0 0
      %947 = vmatprep.subr.bf16.mxu0 0
      %948 = vmatpush1.bf16.msra.mxu0 0
      %949 = vmatprep.subr.bf16.mxu0 0
      %950 = vmatpush1.bf16.msra.mxu0 0
      %951 = vmatprep.subr.bf16.mxu0 0
      %952 = vmatpush1.bf16.msra.mxu0 0
      %953 = vmatprep.subr.bf16.mxu0 0
      %954 = vmatpush1.bf16.msra.mxu0 0
      %955 = vmatprep.subr.bf16.mxu0 0
      %956 = vmatpush1.bf16.msra.mxu0 0
      %957 = vmatprep.subr.bf16.mxu0 0
      %958 = vmatpush1.bf16.msra.mxu0 0
      %959 = vmatprep.subr.bf16.mxu0 0
      %960 = vmatpush1.bf16.msra.mxu0 0
      %961 = vmatprep.subr.bf16.mxu0 0
      %962 = vmatpush1.bf16.msra.mxu0 0
      %963 = vmatprep.subr.bf16.mxu0 0
      %964 = vmatpush1.bf16.msra.mxu0 0
      %965 = vmatprep.subr.bf16.mxu0 0
      %966 = vmatpush1.bf16.msra.mxu0 0
      %967 = vmatprep.subr.bf16.mxu0 0
      %968 = vmatpush1.bf16.msra.mxu0 0
      %969 = vmatprep.subr.bf16.mxu0 0
      %970 = vmatpush1.bf16.msra.mxu0 0
      %971 = vmatprep.subr.bf16.mxu0 0
      %972 = vmatpush1.bf16.msra.mxu0 0
      %973 = vmatprep.mubr.bf16.mxu0 0
      %974 = vmatmul.mubr.bf16.gmra.mrb[0].mxu0 %v924
      %v975 = vpop.f32.mrb[0].mxu0
      %v976 = vadd.f32 0.0, %v975
      %v977 = vpop.f32.mrb[0].mxu0
      %v978 = vpop.f32.mrb[0].mxu0
      %v979 = vadd.f32 0.0, %v978
      %v980 = vpop.f32.mrb[0].mxu0
      %981 = vmatprep.mubr.bf16.mxu0 0
      %982 = vmatmul.mubr.bf16.gmra.mrb[0].mxu0 %v927
      %v983 = vpop.f32.mrb[0].mxu0
      %v984 = vadd.f32 0.0, %v983
      %v985 = vpop.f32.mrb[0].mxu0
      %v986 = vpop.f32.mrb[0].mxu0
      %v987 = vadd.f32 0.0, %v986
      %v988 = vpop.f32.mrb[0].mxu0
      %989 = vmatprep.mubr.bf16.mxu0 0
      %990 = vmatmul.mubr.bf16.gmra.mrb[0].mxu0 %v930
      %v991 = vpop.f32.mrb[0].mxu0
      %v992 = vadd.f32 0.0, %v991
      %v993 = vpop.f32.mrb[0].mxu0
      %v994 = vpop.f32.mrb[0].mxu0
      %v995 = vadd.f32 0.0, %v994
      %v996 = vpop.f32.mrb[0].mxu0
      %997 = vmatprep.mubr.bf16.mxu0 0
      %998 = vmatmul.mubr.bf16.gmra.mrb[0].mxu0 %v933
      %v999 = vpop.f32.mrb[0].mxu0
      %v1000 = vadd.f32 0.0, %v999
      %v1001 = vpop.f32.mrb[0].mxu0
      %v1002 = vpop.f32.mrb[0].mxu0
      %v1003 = vadd.f32 0.0, %v1002
      %v1004 = vpop.f32.mrb[0].mxu0
      %1005 = vmatprep.mubr.bf16.mxu0 0
      %1006 = vmatmul.mubr.bf16.gmra.mrb[0].mxu0 %v936
      %v1007 = vpop.f32.mrb[0].mxu0
      %v1008 = vadd.f32 0.0, %v1007
      %v1009 = vpop.f32.mrb[0].mxu0
      %v1010 = vpop.f32.mrb[0].mxu0
      %v1011 = vpop.f32.mrb[0].mxu0
      %1012 = vdwg.mxu0
      %v1013 = vadd.f32 %v838, %v976
      %v1014 = vadd.f32 %v839, %v979
      %v1015 = vadd.f32 %v840, %v984
      %v1016 = vadd.f32 %v841, %v987
      %v1017 = vadd.f32 %v842, %v992
      %v1018 = vadd.f32 %v843, %v995
      %v1019 = vadd.f32 %v844, %v1000
      %v1020 = vadd.f32 %v845, %v1003
      %v1021 = vadd.f32 %v846, %v1008
      %v1022 = vld [vmem:[%s234 + $0x4] sm:$0xe]
      %s1023 = scalar_lea.vmem %s3, 4
      %v1024 = vld [vmem:[%s1023] sm:$0x3]
      %v1026 = vunpack.c.l.b16 %v1022
      %v1027 = vpack.c.b16 %v518, %v1026
      %vm1028 = vcmask 1046528
      %v1029 = vrot.slane %v1027, 1
      %v1030 = vrot.slane %v528, 1
      %v1031 = vsel %vm1028, %v1029, %v1030
      %v1032 = vrot.slane %v529, 1
      %v1033 = vsel %vm1028, %v1030, %v1032
      %v1034 = vrot.slane %v530, 1
      %v1035 = vsel %vm1028, %v1032, %v1034
      %v1036 = vrot.slane %v531, 1
      %v1037 = vsel %vm1028, %v1034, %v1036
      %v1039 = vsel %vm746, %v1031, 0
      %v1042 = vsel %vm746, %v1033, 0
      %v1045 = vsel %vm746, %v1035, 0
      %v1048 = vsel %vm746, %v1037, 0
      %v1051 = vsel %vm746, %v1036, 0
      %v1054 = vsel %vm762, %v1024, 0
      %1056 = vmatprep.subr.bf16.mxu0 0
      %1057 = vmatpush1.bf16.msra.mxu0 %v1054
      %1058 = vmatprep.subr.bf16.mxu0 0
      %1059 = vmatpush1.bf16.msra.mxu0 0
      %1060 = vmatprep.subr.bf16.mxu0 0
      %1061 = vmatpush1.bf16.msra.mxu0 0
      %1062 = vmatprep.subr.bf16.mxu0 0
      %1063 = vmatpush1.bf16.msra.mxu0 0
      %1064 = vmatprep.subr.bf16.mxu0 0
      %1065 = vmatpush1.bf16.msra.mxu0 0
      %1066 = vmatprep.subr.bf16.mxu0 0
      %1067 = vmatpush1.bf16.msra.mxu0 0
      %1068 = vmatprep.subr.bf16.mxu0 0
      %1069 = vmatpush1.bf16.msra.mxu0 0
      %1070 = vmatprep.subr.bf16.mxu0 0
      %1071 = vmatpush1.bf16.msra.mxu0 0
      %1072 = vmatprep.subr.bf16.mxu0 0
      %1073 = vmatpush1.bf16.msra.mxu0 0
      %1074 = vmatprep.subr.bf16.mxu0 0
      %1075 = vmatpush1.bf16.msra.mxu0 0
      %1076 = vmatprep.subr.bf16.mxu0 0
      %1077 = vmatpush1.bf16.msra.mxu0 0
      %1078 = vmatprep.subr.bf16.mxu0 0
      %1079 = vmatpush1.bf16.msra.mxu0 0
      %1080 = vmatprep.subr.bf16.mxu0 0
      %1081 = vmatpush1.bf16.msra.mxu0 0
      %1082 = vmatprep.subr.bf16.mxu0 0
      %1083 = vmatpush1.bf16.msra.mxu0 0
      %1084 = vmatprep.subr.bf16.mxu0 0
      %1085 = vmatpush1.bf16.msra.mxu0 0
      %1086 = vmatprep.subr.bf16.mxu0 0
      %1087 = vmatpush1.bf16.msra.mxu0 0
      %1088 = vmatprep.mubr.bf16.mxu0 0
      %1089 = vmatmul.mubr.bf16.gmra.mrb[0].mxu0 %v1039
      %v1090 = vpop.f32.mrb[0].mxu0
      %v1091 = vadd.f32 0.0, %v1090
      %v1092 = vpop.f32.mrb[0].mxu0
      %v1093 = vpop.f32.mrb[0].mxu0
      %v1094 = vadd.f32 0.0, %v1093
      %v1095 = vpop.f32.mrb[0].mxu0
      %1096 = vmatprep.mubr.bf16.mxu0 0
      %1097 = vmatmul.mubr.bf16.gmra.mrb[0].mxu0 %v1042
      %v1098 = vpop.f32.mrb[0].mxu0
      %v1099 = vadd.f32 0.0, %v1098
      %v1100 = vpop.f32.mrb[0].mxu0
      %v1101 = vpop.f32.mrb[0].mxu0
      %v1102 = vadd.f32 0.0, %v1101
      %v1103 = vpop.f32.mrb[0].mxu0
      %1104 = vmatprep.mubr.bf16.mxu0 0
      %1105 = vmatmul.mubr.bf16.gmra.mrb[0].mxu0 %v1045
      %v1106 = vpop.f32.mrb[0].mxu0
      %v1107 = vadd.f32 0.0, %v1106
      %v1108 = vpop.f32.mrb[0].mxu0
      %v1109 = vpop.f32.mrb[0].mxu0
      %v1110 = vadd.f32 0.0, %v1109
      %v1111 = vpop.f32.mrb[0].mxu0
      %1112 = vmatprep.mubr.bf16.mxu0 0
      %1113 = vmatmul.mubr.bf16.gmra.mrb[0].mxu0 %v1048
      %v1114 = vpop.f32.mrb[0].mxu0
      %v1115 = vadd.f32 0.0, %v1114
      %v1116 = vpop.f32.mrb[0].mxu0
      %v1117 = vpop.f32.mrb[0].mxu0
      %v1118 = vadd.f32 0.0, %v1117
      %v1119 = vpop.f32.mrb[0].mxu0
      %1120 = vmatprep.mubr.bf16.mxu0 0
      %1121 = vmatmul.mubr.bf16.gmra.mrb[0].mxu0 %v1051
      %v1122 = vpop.f32.mrb[0].mxu0
      %v1123 = vadd.f32 0.0, %v1122
      %v1124 = vpop.f32.mrb[0].mxu0
      %v1125 = vpop.f32.mrb[0].mxu0
      %v1126 = vpop.f32.mrb[0].mxu0
      %1127 = vdwg.mxu0
      %v1128 = vadd.f32 %v1013, %v1091
      %v1129 = vadd.f32 %v1014, %v1094
      %v1130 = vadd.f32 %v1015, %v1099
      %v1131 = vadd.f32 %v1016, %v1102
      %v1132 = vadd.f32 %v1017, %v1107
      %v1133 = vadd.f32 %v1018, %v1110
      %v1134 = vadd.f32 %v1019, %v1115
      %v1135 = vadd.f32 %v1020, %v1118
      %v1136 = vadd.f32 %v1021, %v1123
      %v1137 = vld [vmem:[%s4] sm:$0x1]
      %v1139 = vlaneseq
      %v1140 = vshrl.u32 %v1139, 7
      %v1141 = vsub.s32 0, %v1140
      %v1142 = vrot.slane %v1137, %v1141
      %v1144 = vadd.f32 %v1128, %v1142
      %v1145 = vadd.f32 %v1129, %v1142
      %v1146 = vadd.f32 %v1130, %v1142
      %v1147 = vadd.f32 %v1131, %v1142
      %v1148 = vadd.f32 %v1132, %v1142
      %v1149 = vadd.f32 %v1133, %v1142
      %v1150 = vadd.f32 %v1134, %v1142
      %v1151 = vadd.f32 %v1135, %v1142
      %v1152 = vadd.f32 %v1136, %v1142
      %1153 = vst.msk [vmem:[%s244] sm:$0xff] %vm746, %v1144
      %1154 = vst.msk [vmem:[%s244 + $0x8] sm:$0xff] %vm746, %v1145
      %1155 = vst.msk [vmem:[%s244 + $0x10] sm:$0xff] %vm746, %v1146
      %1156 = vst.msk [vmem:[%s244 + $0x18] sm:$0xff] %vm746, %v1147
      %1157 = vst.msk [vmem:[%s244 + $0x20] sm:$0xff] %vm746, %v1148
      %1158 = vst.msk [vmem:[%s244 + $0x28] sm:$0xff] %vm746, %v1149
      %1159 = vst.msk [vmem:[%s244 + $0x30] sm:$0xff] %vm746, %v1150
      %1160 = vst.msk [vmem:[%s244 + $0x38] sm:$0xff] %vm746, %v1151
      %1161 = vst.msk [vmem:[%s244 + $0x40] sm:$0xff] %vm746, %v1152
      %p1162 = scmp.lt.s32.totalorder %s16, 1
      %s1163 = scalar_select %p1162, %s16, 1
      %s1164 = smul.addr %s1163, 9
      %s1165 = smul.addr %s1164, 8
      %s1166 = scalar_lea.vmem %s5, %s1165
      // Predicated region
      $region41: #{tpu_custom_call.1} parent=39 // pred_check
        %p1167 = pneg %p149
      $region42: #{tpu_custom_call.1} parent=39 // pred_check_branch
        %1169 = sbr.rel (%p1167) target = $region44
      $region43: #{tpu_custom_call.1} parent=39 // pred_region
        _
      $region44: #{tpu_custom_call.1} parent=39 // pred_fallthru
        _
    $region40: #{tpu_custom_call.1} parent=5 // pred_fallthru
      _
    %p1170 = scmp.le.s32.totalorder 2, %s11
    // Predicated region
    $region45: #{tpu_custom_call.1} parent=5 // pred_check
      %p1171 = pneg %p1170
    $region46: #{tpu_custom_call.1} parent=5 // pred_check_branch
      %1173 = sbr.rel (%p1171) target = $region48
    $region47: #{tpu_custom_call.1} parent=5 // pred_region
      %s1174 = ssub.s32 %s11, 2
      // Predicated region
      $region49: #{tpu_custom_call.1} parent=47 // pred_check
        %p1175 = pneg %p155
      $region50: #{tpu_custom_call.1} parent=47 // pred_check_branch
        %1177 = sbr.rel (%p1175) target = $region52
      $region51: #{tpu_custom_call.1} parent=47 // pred_region
        %p1178 = scmp.lt.s32.totalorder %s17, 1
        %s1179 = scalar_select %p1178, %s17, 1
        %s1180 = smul.addr %s1179, 9
        %s1181 = smul.addr %s1180, 8
        %s1182 = scalar_lea.vmem %s5, %s1181
      $region52: #{tpu_custom_call.1} parent=47 // pred_fallthru
        _
    $region48: #{tpu_custom_call.1} parent=5 // pred_fallthru
      _
  $region6: #{tpu_custom_call.1} parent=0 // loop_footer
    %s15 = sadd.s32 1, %s11
  $region7: #{tpu_custom_call.1} parent=0 // loop_footer_branch
    %10 = sbr.rel target = $region3
  $region8: #{tpu_custom_call.1} parent=0 // loop_exit
    _

</llo_original>
